<compile_context>
chip_gen: v6e
topology: v6e:2x2x1
jax: 0.10.0
libtpu: 0.0.40
codegen_flags: <defaults>
</compile_context>

<pallas_src>
import math

import jax
import jax.numpy as jnp
from jax import lax
from jax.experimental import pallas as pl
from jax.experimental.pallas import tpu as pltpu

# -------- problem sizes (small, consistent with the module) --------
BATCH = 2
T = 8            # sequence length
H = 4            # number of heads
D_MODEL = 32     # hidden size (d_model % h == 0)
D_K = D_MODEL // H
SPAN_NUM = 3
NEG_INF = -1000000000.0  # value used by masked_fill in the PyTorch code

GROUP = H * T                              # 32 lanes per (batch, span) group
OUT_COLS = BATCH * SPAN_NUM * GROUP        # 192 valid lanes
OUT_COLS_PAD = 256                         # padded to a multiple of 128 (unmasked vst)
PAD_COLS = OUT_COLS_PAD - OUT_COLS


# ---------------------------------------------------------------------------
# Pallas kernel (single invocation, whole problem):
#   qkT = W_fused^T @ x^T + b            (one MXU matmul, (2D, B*T))
#   per head: scores = (q_h^T)^T . k_h^T  via dot_general contracting dim 0
#             (sublane-aligned row slices feed the MXU directly, trans_a form)
#   assemble lane-dense (T, 256) tile: [b0|b0|b0|b1|b1|b1|pad] x (h, j) columns
#   one (T, 256) keep mask from iota + SMEM span pairs, one jnp.where, ONE store
# ---------------------------------------------------------------------------
def _masked_scores_kernel(span_ref, xT_ref, wT_ref, b_ref, o_ref):
    # Projection in transposed form: (2D, D) @ (D, B*T) -> (2D, B*T)
    qkT = jnp.dot(wT_ref[...], xT_ref[...],
                  preferred_element_type=jnp.float32) + b_ref[...]

    # Per-head scores; head split is a sublane (row) slice at multiples of 8.
    # One matmul per head covers both batches (cross-batch blocks discarded,
    # trivial at this size).
    # TODO(synk): if profiling ever shows MXU fill latency on the critical path
    # (v6e/v7x), merge the 4 pushes against a block-diagonal RHS.
    blocks = [[None] * H for _ in range(BATCH)]
    for h in range(H):
        qhT = qkT[h * D_K:(h + 1) * D_K, :]                         # (D_K, B*T)
        khT = qkT[D_MODEL + h * D_K:D_MODEL + (h + 1) * D_K, :]     # (D_K, B*T)
        # A^T . B form (contract dim 0 with dim 0) -> (B*T, B*T)
        s_full = lax.dot_general(qhT, khT, (((0,), (0,)), ((), ())),
                                 preferred_element_type=jnp.float32)
        for b in range(BATCH):
            blocks[b][h] = s_full[b * T:(b + 1) * T, b * T:(b + 1) * T]  # (T, T)

    # Assemble the full lane-dense score tile: columns ordered (b, s, h, j),
    # scores broadcast across SPAN_NUM, zero pad to 256 lanes.
    per_batch = [jnp.concatenate(blocks[b], axis=1) for b in range(BATCH)]  # (T, H*T)
    pieces = [per_batch[b] for b in range(BATCH) for _ in range(SPAN_NUM)]
    pieces.append(jnp.zeros((T, PAD_COLS), jnp.float32))
    scores_tile = jnp.concatenate(pieces, axis=1)                   # (T, 256)

    # Single (T, 256) keep mask built once: decode (b, s) per 32-lane group,
    # row kept iff it lies inside span [start, end) (numpy slice semantics:
    # negative indices wrap, then clip to [0, T]).
    col = lax.broadcasted_iota(jnp.int32, (T, OUT_COLS_PAD), 1)
    row = lax.broadcasted_iota(jnp.int32, (T, OUT_COLS_PAD), 0)
    keep = jnp.zeros((T, OUT_COLS_PAD), jnp.bool_)
    for b in range(BATCH):
        for s in range(SPAN_NUM):
            g = b * SPAN_NUM + s
            start = span_ref[g * 2]
            end = span_ref[g * 2 + 1]
            start = jnp.clip(jnp.where(start < 0, start + T, start), 0, T)
            end = jnp.clip(jnp.where(end < 0, end + T, end), 0, T)
            in_g = (col >= g * GROUP) & (col < (g + 1) * GROUP)
            keep = keep | (in_g & (row >= start) & (row < end))

    # One unmasked, 128-lane-aligned store of the whole tile.
    o_ref[...] = jnp.where(keep, scores_tile, jnp.float32(NEG_INF))


def masked_attention_scores(sequence_tensor, span_indices, wq_t, bq, wk_t, bk):
    """sequence_tensor: (B, T, D); span_indices: (B, SPAN_NUM, 2) int32.
    Returns masked scores (B * SPAN_NUM, H, T, T) float32 (same as PyTorch `scores`)."""
    inv_sqrt_dk = 1.0 / math.sqrt(D_K)
    # Fuse Q|K projections (transposed form); fold 1/sqrt(d_k) into the Q half.
    w_fused_t = jnp.concatenate([(wq_t * inv_sqrt_dk).T, wk_t.T], axis=0)   # (2D, D)
    b_fused = jnp.concatenate([bq * inv_sqrt_dk, bk])[:, None]              # (2D, 1)
    x_t = sequence_tensor.reshape(BATCH * T, D_MODEL).T                     # (D, B*T)
    spans_flat = span_indices.reshape(-1).astype(jnp.int32)                 # (B*S*2,)

    flops = 2 * (BATCH * T) * D_MODEL * (2 * D_MODEL) \
        + 2 * H * (BATCH * T) ** 2 * D_K
    bytes_accessed = 4 * (x_t.size + w_fused_t.size + b_fused.size
                          + spans_flat.size + T * OUT_COLS_PAD)

    out = pl.pallas_call(
        _masked_scores_kernel,
        out_shape=jax.ShapeDtypeStruct((T, OUT_COLS_PAD), jnp.float32),
        grid_spec=pltpu.PrefetchScalarGridSpec(
            num_scalar_prefetch=1,            # span indices -> SMEM
            grid=(1,),
            in_specs=[
                pl.BlockSpec((D_MODEL, BATCH * T), lambda i, spans: (0, 0)),      # x^T
                pl.BlockSpec((2 * D_MODEL, D_MODEL), lambda i, spans: (0, 0)),    # [Wq|Wk] fused, transposed
                pl.BlockSpec((2 * D_MODEL, 1), lambda i, spans: (0, 0)),          # [bq|bk] column
            ],
            out_specs=pl.BlockSpec((T, OUT_COLS_PAD), lambda i, spans: (0, 0)),
        ),
        compiler_params=pltpu.CompilerParams(
            dimension_semantics=("arbitrary",)),
        cost_estimate=pl.CostEstimate(flops=flops, transcendentals=0,
                                      bytes_accessed=bytes_accessed),
    )(spans_flat, x_t, w_fused_t, b_fused)

    # Wrapper-side layout plumbing: drop pad, (i, (b, s, h, j)) -> (b*s, h, i, j)
    out = out[:, :OUT_COLS].reshape(T, BATCH, SPAN_NUM, H, T)
    out = jnp.transpose(out, (1, 2, 3, 0, 4))
    return out.reshape(BATCH * SPAN_NUM, H, T, T)


# ---------------------------------------------------------------------------
# Glue used only by the pure-JAX reference: span indices -> {0,1} mask,
# mimicking numpy slice semantics (mask[b, s, start:end] = 1).
# ---------------------------------------------------------------------------
def spans_to_mask(span_indices, t):
    start = span_indices[..., 0]
    end = span_indices[..., 1]
    start = jnp.where(start < 0, start + t, start)
    end = jnp.where(end < 0, end + t, end)
    start = jnp.clip(start, 0, t)
    end = jnp.clip(end, 0, t)
    pos = jnp.arange(t)
    mask = (pos[None, None, :] >= start[..., None]) & (pos[None, None, :] < end[..., None])
    return mask.astype(jnp.int32)


# ---------------------------------------------------------------------------
# Pure-JAX reference of the same forward math (for the correctness check)
# ---------------------------------------------------------------------------
def reference(x, span_indices, wq_t, bq, wk_t, bk):
    q = x @ wq_t + bq
    k = x @ wk_t + bk
    q = q.reshape(BATCH, T, H, D_K).transpose(0, 2, 1, 3)
    k = k.reshape(BATCH, T, H, D_K).transpose(0, 2, 1, 3)
    scores = jnp.einsum("bhid,bhjd->bhij", q, k) / math.sqrt(D_K)
    span_mask = spans_to_mask(span_indices, T)                       # (B, S, T)
    scores = jnp.broadcast_to(scores[:, None], (BATCH, SPAN_NUM, H, T, T))
    keep = span_mask[:, :, None, :, None] != 0
    out = jnp.where(keep, scores, jnp.float32(NEG_INF))
    return out.reshape(BATCH * SPAN_NUM, H, T, T)


if __name__ == "__main__":
    key = jax.random.PRNGKey(0)
    kx, kwq, kbq, kwk, kbk = jax.random.split(key, 5)

    # Deterministic synthetic parameters (PyTorch nn.Linear(d_model, d_model):
    # weight (out, in); we store the transposed form (in, out) for x @ W^T).
    scale = 1.0 / math.sqrt(D_MODEL)
    sequence_tensor = jax.random.normal(kx, (BATCH, T, D_MODEL), dtype=jnp.float32)
    wq_t = jax.random.normal(kwq, (D_MODEL, D_MODEL), dtype=jnp.float32) * scale
    bq = jax.random.normal(kbq, (D_MODEL,), dtype=jnp.float32) * scale
    wk_t = jax.random.normal(kwk, (D_MODEL, D_MODEL), dtype=jnp.float32) * scale
    bk = jax.random.normal(kbk, (D_MODEL,), dtype=jnp.float32) * scale
    # TODO(synk): the 3rd/4th linears (value/output proj), dropout and the
    # attention-weighted aggregation are never executed by the truncated PyTorch
    # forward (it stops after masking the scores), so they are omitted.

    # span_indices: (batch, span_num, 2) with [start, end) pairs; [-1,-1] => empty span
    span_indices = jnp.array(
        [[[1, 4], [0, 8], [-1, -1]],
         [[2, 6], [3, 3], [5, 8]]], dtype=jnp.int32)

    out = masked_attention_scores(sequence_tensor, span_indices, wq_t, bq, wk_t, bk)
    out = jax.block_until_ready(out)

    ref = reference(sequence_tensor, span_indices, wq_t, bq, wk_t, bk)
    assert out.shape == (BATCH * SPAN_NUM, H, T, T)
    assert jnp.allclose(out, ref, atol=1e-4, rtol=1e-4), "mismatch vs reference"

    print("KERNEL_OK")
</pallas_src>

<mosaic_0001>
module attributes {stable_mosaic.version = 11 : i64} {
  func.func @_masked_scores_kernel(%arg0: i32, %arg1: memref<12xi32, #tpu.memory_space<smem>>, %arg2: memref<32x16xf32, #tpu.memory_space<vmem>>, %arg3: memref<64x32xf32, #tpu.memory_space<vmem>>, %arg4: memref<64x1xf32, #tpu.memory_space<vmem>>, %arg5: memref<8x256xf32, #tpu.memory_space<vmem>>) attributes {dimension_semantics = [#tpu.dimension_semantics<arbitrary>], iteration_bounds = array<i64: 1>, scalar_prefetch = 1 : i64, scratch_operands = 0 : i64, tpu.core_type = #tpu.core_type<tc>, window_params = [{pipeline_mode = #tpu.pipeline_mode<synchronous>, transform_indices = @transform_0, window_bounds = array<i64: 32, 16>}, {pipeline_mode = #tpu.pipeline_mode<synchronous>, transform_indices = @transform_1, window_bounds = array<i64: 64, 32>}, {pipeline_mode = #tpu.pipeline_mode<synchronous>, transform_indices = @transform_2, window_bounds = array<i64: 64, 1>}, {pipeline_mode = #tpu.pipeline_mode<synchronous>, transform_indices = @transform_3, window_bounds = array<i64: 8, 256>}]} {
    %c0 = arith.constant 0 : index
    %c0_0 = arith.constant 0 : index
    %0 = vector.load %arg3[%c0, %c0_0] : memref<64x32xf32, #tpu.memory_space<vmem>>, vector<64x32xf32>
    %c0_1 = arith.constant 0 : index
    %c0_2 = arith.constant 0 : index
    %1 = vector.load %arg2[%c0_1, %c0_2] : memref<32x16xf32, #tpu.memory_space<vmem>>, vector<32x16xf32>
    %cst = arith.constant dense<0.000000e+00> : vector<64x16xf32>
    %2 = tpu.matmul %0, %1, %cst {dimension_numbers = #tpu.dot_dimension_numbers<[1], [0], [0], [1], [0, 0, 1, 1], [], []>} : vector<64x32xf32>, vector<32x16xf32>, vector<64x16xf32> -> vector<64x16xf32>
    %c0_3 = arith.constant 0 : index
    %c0_4 = arith.constant 0 : index
    %3 = vector.load %arg4[%c0_3, %c0_4] : memref<64x1xf32, #tpu.memory_space<vmem>>, vector<64x1xf32>
    %4 = vector.broadcast %3 : vector<64x1xf32> to vector<64x16xf32>
    %5 = arith.addf %2, %4 : vector<64x16xf32>
    %6 = vector.extract_strided_slice %5 {offsets = [0, 0], sizes = [8, 16], strides = [1, 1]} : vector<64x16xf32> to vector<8x16xf32>
    %7 = vector.extract_strided_slice %5 {offsets = [32, 0], sizes = [8, 16], strides = [1, 1]} : vector<64x16xf32> to vector<8x16xf32>
    %cst_5 = arith.constant dense<0.000000e+00> : vector<16x16xf32>
    %8 = tpu.matmul %6, %7, %cst_5 {dimension_numbers = #tpu.dot_dimension_numbers<[0], [0], [1], [1], [0, 1, 1, 1], [], []>} : vector<8x16xf32>, vector<8x16xf32>, vector<16x16xf32> -> vector<16x16xf32>
    %9 = vector.extract_strided_slice %8 {offsets = [0, 0], sizes = [8, 8], strides = [1, 1]} : vector<16x16xf32> to vector<8x8xf32>
    %10 = vector.extract_strided_slice %8 {offsets = [8, 8], sizes = [8, 8], strides = [1, 1]} : vector<16x16xf32> to vector<8x8xf32>
    %11 = vector.extract_strided_slice %5 {offsets = [8, 0], sizes = [8, 16], strides = [1, 1]} : vector<64x16xf32> to vector<8x16xf32>
    %12 = vector.extract_strided_slice %5 {offsets = [40, 0], sizes = [8, 16], strides = [1, 1]} : vector<64x16xf32> to vector<8x16xf32>
    %cst_6 = arith.constant dense<0.000000e+00> : vector<16x16xf32>
    %13 = tpu.matmul %11, %12, %cst_6 {dimension_numbers = #tpu.dot_dimension_numbers<[0], [0], [1], [1], [0, 1, 1, 1], [], []>} : vector<8x16xf32>, vector<8x16xf32>, vector<16x16xf32> -> vector<16x16xf32>
    %14 = vector.extract_strided_slice %13 {offsets = [0, 0], sizes = [8, 8], strides = [1, 1]} : vector<16x16xf32> to vector<8x8xf32>
    %15 = vector.extract_strided_slice %13 {offsets = [8, 8], sizes = [8, 8], strides = [1, 1]} : vector<16x16xf32> to vector<8x8xf32>
    %16 = vector.extract_strided_slice %5 {offsets = [16, 0], sizes = [8, 16], strides = [1, 1]} : vector<64x16xf32> to vector<8x16xf32>
    %17 = vector.extract_strided_slice %5 {offsets = [48, 0], sizes = [8, 16], strides = [1, 1]} : vector<64x16xf32> to vector<8x16xf32>
    %cst_7 = arith.constant dense<0.000000e+00> : vector<16x16xf32>
    %18 = tpu.matmul %16, %17, %cst_7 {dimension_numbers = #tpu.dot_dimension_numbers<[0], [0], [1], [1], [0, 1, 1, 1], [], []>} : vector<8x16xf32>, vector<8x16xf32>, vector<16x16xf32> -> vector<16x16xf32>
    %19 = vector.extract_strided_slice %18 {offsets = [0, 0], sizes = [8, 8], strides = [1, 1]} : vector<16x16xf32> to vector<8x8xf32>
    %20 = vector.extract_strided_slice %18 {offsets = [8, 8], sizes = [8, 8], strides = [1, 1]} : vector<16x16xf32> to vector<8x8xf32>
    %21 = vector.extract_strided_slice %5 {offsets = [24, 0], sizes = [8, 16], strides = [1, 1]} : vector<64x16xf32> to vector<8x16xf32>
    %22 = vector.extract_strided_slice %5 {offsets = [56, 0], sizes = [8, 16], strides = [1, 1]} : vector<64x16xf32> to vector<8x16xf32>
    %cst_8 = arith.constant dense<0.000000e+00> : vector<16x16xf32>
    %23 = tpu.matmul %21, %22, %cst_8 {dimension_numbers = #tpu.dot_dimension_numbers<[0], [0], [1], [1], [0, 1, 1, 1], [], []>} : vector<8x16xf32>, vector<8x16xf32>, vector<16x16xf32> -> vector<16x16xf32>
    %24 = vector.extract_strided_slice %23 {offsets = [0, 0], sizes = [8, 8], strides = [1, 1]} : vector<16x16xf32> to vector<8x8xf32>
    %25 = vector.extract_strided_slice %23 {offsets = [8, 8], sizes = [8, 8], strides = [1, 1]} : vector<16x16xf32> to vector<8x8xf32>
    %26 = tpu.concatenate %9, %14, %19, %24 in 1 : vector<8x8xf32>, vector<8x8xf32>, vector<8x8xf32>, vector<8x8xf32> -> vector<8x32xf32>
    %27 = tpu.concatenate %10, %15, %20, %25 in 1 : vector<8x8xf32>, vector<8x8xf32>, vector<8x8xf32>, vector<8x8xf32> -> vector<8x32xf32>
    %cst_9 = arith.constant 0.000000e+00 : f32
    %28 = vector.broadcast %cst_9 : f32 to vector<8x64xf32>
    %29 = tpu.concatenate %26, %26, %26, %27, %27, %27, %28 in 1 : vector<8x32xf32>, vector<8x32xf32>, vector<8x32xf32>, vector<8x32xf32>, vector<8x32xf32>, vector<8x32xf32>, vector<8x64xf32> -> vector<8x256xf32>
    %30 = tpu.iota {dimensions = array<i32: 1>} : vector<8x256xi32>
    %31 = tpu.iota {dimensions = array<i32: 0>} : vector<8x256xi32>
    %false = arith.constant false
    %32 = vector.broadcast %false : i1 to vector<8x256xi1>
    %c0_10 = arith.constant 0 : index
    %33 = memref.load %arg1[%c0_10] : memref<12xi32, #tpu.memory_space<smem>>
    %c1 = arith.constant 1 : index
    %34 = memref.load %arg1[%c1] : memref<12xi32, #tpu.memory_space<smem>>
    %c0_i32 = arith.constant 0 : i32
    %35 = arith.cmpi slt, %33, %c0_i32 : i32
    %c8_i32 = arith.constant 8 : i32
    %36 = arith.addi %33, %c8_i32 : i32
    %37 = arith.select %35, %36, %33 : i32
    %c0_i32_11 = arith.constant 0 : i32
    %c8_i32_12 = arith.constant 8 : i32
    %38 = arith.maxsi %c0_i32_11, %37 : i32
    %39 = arith.minsi %c8_i32_12, %38 : i32
    %c0_i32_13 = arith.constant 0 : i32
    %40 = arith.cmpi slt, %34, %c0_i32_13 : i32
    %c8_i32_14 = arith.constant 8 : i32
    %41 = arith.addi %34, %c8_i32_14 : i32
    %42 = arith.select %40, %41, %34 : i32
    %c0_i32_15 = arith.constant 0 : i32
    %c8_i32_16 = arith.constant 8 : i32
    %43 = arith.maxsi %c0_i32_15, %42 : i32
    %44 = arith.minsi %c8_i32_16, %43 : i32
    %c0_i32_17 = arith.constant 0 : i32
    %45 = vector.broadcast %c0_i32_17 : i32 to vector<8x256xi32>
    %46 = arith.cmpi sge, %30, %45 : vector<8x256xi32>
    %c32_i32 = arith.constant 32 : i32
    %47 = vector.broadcast %c32_i32 : i32 to vector<8x256xi32>
    %48 = arith.cmpi slt, %30, %47 : vector<8x256xi32>
    %49 = arith.andi %46, %48 : vector<8x256xi1>
    %50 = vector.broadcast %39 : i32 to vector<8x256xi32>
    %51 = arith.cmpi sge, %31, %50 : vector<8x256xi32>
    %52 = arith.andi %49, %51 : vector<8x256xi1>
    %53 = vector.broadcast %44 : i32 to vector<8x256xi32>
    %54 = arith.cmpi slt, %31, %53 : vector<8x256xi32>
    %55 = arith.andi %52, %54 : vector<8x256xi1>
    %56 = arith.ori %32, %55 : vector<8x256xi1>
    %c2 = arith.constant 2 : index
    %57 = memref.load %arg1[%c2] : memref<12xi32, #tpu.memory_space<smem>>
    %c3 = arith.constant 3 : index
    %58 = memref.load %arg1[%c3] : memref<12xi32, #tpu.memory_space<smem>>
    %c0_i32_18 = arith.constant 0 : i32
    %59 = arith.cmpi slt, %57, %c0_i32_18 : i32
    %c8_i32_19 = arith.constant 8 : i32
    %60 = arith.addi %57, %c8_i32_19 : i32
    %61 = arith.select %59, %60, %57 : i32
    %c0_i32_20 = arith.constant 0 : i32
    %c8_i32_21 = arith.constant 8 : i32
    %62 = arith.maxsi %c0_i32_20, %61 : i32
    %63 = arith.minsi %c8_i32_21, %62 : i32
    %c0_i32_22 = arith.constant 0 : i32
    %64 = arith.cmpi slt, %58, %c0_i32_22 : i32
    %c8_i32_23 = arith.constant 8 : i32
    %65 = arith.addi %58, %c8_i32_23 : i32
    %66 = arith.select %64, %65, %58 : i32
    %c0_i32_24 = arith.constant 0 : i32
    %c8_i32_25 = arith.constant 8 : i32
    %67 = arith.maxsi %c0_i32_24, %66 : i32
    %68 = arith.minsi %c8_i32_25, %67 : i32
    %c32_i32_26 = arith.constant 32 : i32
    %69 = vector.broadcast %c32_i32_26 : i32 to vector<8x256xi32>
    %70 = arith.cmpi sge, %30, %69 : vector<8x256xi32>
    %c64_i32 = arith.constant 64 : i32
    %71 = vector.broadcast %c64_i32 : i32 to vector<8x256xi32>
    %72 = arith.cmpi slt, %30, %71 : vector<8x256xi32>
    %73 = arith.andi %70, %72 : vector<8x256xi1>
    %74 = vector.broadcast %63 : i32 to vector<8x256xi32>
    %75 = arith.cmpi sge, %31, %74 : vector<8x256xi32>
    %76 = arith.andi %73, %75 : vector<8x256xi1>
    %77 = vector.broadcast %68 : i32 to vector<8x256xi32>
    %78 = arith.cmpi slt, %31, %77 : vector<8x256xi32>
    %79 = arith.andi %76, %78 : vector<8x256xi1>
    %80 = arith.ori %56, %79 : vector<8x256xi1>
    %c4 = arith.constant 4 : index
    %81 = memref.load %arg1[%c4] : memref<12xi32, #tpu.memory_space<smem>>
    %c5 = arith.constant 5 : index
    %82 = memref.load %arg1[%c5] : memref<12xi32, #tpu.memory_space<smem>>
    %c0_i32_27 = arith.constant 0 : i32
    %83 = arith.cmpi slt, %81, %c0_i32_27 : i32
    %c8_i32_28 = arith.constant 8 : i32
    %84 = arith.addi %81, %c8_i32_28 : i32
    %85 = arith.select %83, %84, %81 : i32
    %c0_i32_29 = arith.constant 0 : i32
    %c8_i32_30 = arith.constant 8 : i32
    %86 = arith.maxsi %c0_i32_29, %85 : i32
    %87 = arith.minsi %c8_i32_30, %86 : i32
    %c0_i32_31 = arith.constant 0 : i32
    %88 = arith.cmpi slt, %82, %c0_i32_31 : i32
    %c8_i32_32 = arith.constant 8 : i32
    %89 = arith.addi %82, %c8_i32_32 : i32
    %90 = arith.select %88, %89, %82 : i32
    %c0_i32_33 = arith.constant 0 : i32
    %c8_i32_34 = arith.constant 8 : i32
    %91 = arith.maxsi %c0_i32_33, %90 : i32
    %92 = arith.minsi %c8_i32_34, %91 : i32
    %c64_i32_35 = arith.constant 64 : i32
    %93 = vector.broadcast %c64_i32_35 : i32 to vector<8x256xi32>
    %94 = arith.cmpi sge, %30, %93 : vector<8x256xi32>
    %c96_i32 = arith.constant 96 : i32
    %95 = vector.broadcast %c96_i32 : i32 to vector<8x256xi32>
    %96 = arith.cmpi slt, %30, %95 : vector<8x256xi32>
    %97 = arith.andi %94, %96 : vector<8x256xi1>
    %98 = vector.broadcast %87 : i32 to vector<8x256xi32>
    %99 = arith.cmpi sge, %31, %98 : vector<8x256xi32>
    %100 = arith.andi %97, %99 : vector<8x256xi1>
    %101 = vector.broadcast %92 : i32 to vector<8x256xi32>
    %102 = arith.cmpi slt, %31, %101 : vector<8x256xi32>
    %103 = arith.andi %100, %102 : vector<8x256xi1>
    %104 = arith.ori %80, %103 : vector<8x256xi1>
    %c6 = arith.constant 6 : index
    %105 = memref.load %arg1[%c6] : memref<12xi32, #tpu.memory_space<smem>>
    %c7 = arith.constant 7 : index
    %106 = memref.load %arg1[%c7] : memref<12xi32, #tpu.memory_space<smem>>
    %c0_i32_36 = arith.constant 0 : i32
    %107 = arith.cmpi slt, %105, %c0_i32_36 : i32
    %c8_i32_37 = arith.constant 8 : i32
    %108 = arith.addi %105, %c8_i32_37 : i32
    %109 = arith.select %107, %108, %105 : i32
    %c0_i32_38 = arith.constant 0 : i32
    %c8_i32_39 = arith.constant 8 : i32
    %110 = arith.maxsi %c0_i32_38, %109 : i32
    %111 = arith.minsi %c8_i32_39, %110 : i32
    %c0_i32_40 = arith.constant 0 : i32
    %112 = arith.cmpi slt, %106, %c0_i32_40 : i32
    %c8_i32_41 = arith.constant 8 : i32
    %113 = arith.addi %106, %c8_i32_41 : i32
    %114 = arith.select %112, %113, %106 : i32
    %c0_i32_42 = arith.constant 0 : i32
    %c8_i32_43 = arith.constant 8 : i32
    %115 = arith.maxsi %c0_i32_42, %114 : i32
    %116 = arith.minsi %c8_i32_43, %115 : i32
    %c96_i32_44 = arith.constant 96 : i32
    %117 = vector.broadcast %c96_i32_44 : i32 to vector<8x256xi32>
    %118 = arith.cmpi sge, %30, %117 : vector<8x256xi32>
    %c128_i32 = arith.constant 128 : i32
    %119 = vector.broadcast %c128_i32 : i32 to vector<8x256xi32>
    %120 = arith.cmpi slt, %30, %119 : vector<8x256xi32>
    %121 = arith.andi %118, %120 : vector<8x256xi1>
    %122 = vector.broadcast %111 : i32 to vector<8x256xi32>
    %123 = arith.cmpi sge, %31, %122 : vector<8x256xi32>
    %124 = arith.andi %121, %123 : vector<8x256xi1>
    %125 = vector.broadcast %116 : i32 to vector<8x256xi32>
    %126 = arith.cmpi slt, %31, %125 : vector<8x256xi32>
    %127 = arith.andi %124, %126 : vector<8x256xi1>
    %128 = arith.ori %104, %127 : vector<8x256xi1>
    %c8 = arith.constant 8 : index
    %129 = memref.load %arg1[%c8] : memref<12xi32, #tpu.memory_space<smem>>
    %c9 = arith.constant 9 : index
    %130 = memref.load %arg1[%c9] : memref<12xi32, #tpu.memory_space<smem>>
    %c0_i32_45 = arith.constant 0 : i32
    %131 = arith.cmpi slt, %129, %c0_i32_45 : i32
    %c8_i32_46 = arith.constant 8 : i32
    %132 = arith.addi %129, %c8_i32_46 : i32
    %133 = arith.select %131, %132, %129 : i32
    %c0_i32_47 = arith.constant 0 : i32
    %c8_i32_48 = arith.constant 8 : i32
    %134 = arith.maxsi %c0_i32_47, %133 : i32
    %135 = arith.minsi %c8_i32_48, %134 : i32
    %c0_i32_49 = arith.constant 0 : i32
    %136 = arith.cmpi slt, %130, %c0_i32_49 : i32
    %c8_i32_50 = arith.constant 8 : i32
    %137 = arith.addi %130, %c8_i32_50 : i32
    %138 = arith.select %136, %137, %130 : i32
    %c0_i32_51 = arith.constant 0 : i32
    %c8_i32_52 = arith.constant 8 : i32
    %139 = arith.maxsi %c0_i32_51, %138 : i32
    %140 = arith.minsi %c8_i32_52, %139 : i32
    %c128_i32_53 = arith.constant 128 : i32
    %141 = vector.broadcast %c128_i32_53 : i32 to vector<8x256xi32>
    %142 = arith.cmpi sge, %30, %141 : vector<8x256xi32>
    %c160_i32 = arith.constant 160 : i32
    %143 = vector.broadcast %c160_i32 : i32 to vector<8x256xi32>
    %144 = arith.cmpi slt, %30, %143 : vector<8x256xi32>
    %145 = arith.andi %142, %144 : vector<8x256xi1>
    %146 = vector.broadcast %135 : i32 to vector<8x256xi32>
    %147 = arith.cmpi sge, %31, %146 : vector<8x256xi32>
    %148 = arith.andi %145, %147 : vector<8x256xi1>
    %149 = vector.broadcast %140 : i32 to vector<8x256xi32>
    %150 = arith.cmpi slt, %31, %149 : vector<8x256xi32>
    %151 = arith.andi %148, %150 : vector<8x256xi1>
    %152 = arith.ori %128, %151 : vector<8x256xi1>
    %c10 = arith.constant 10 : index
    %153 = memref.load %arg1[%c10] : memref<12xi32, #tpu.memory_space<smem>>
    %c11 = arith.constant 11 : index
    %154 = memref.load %arg1[%c11] : memref<12xi32, #tpu.memory_space<smem>>
    %c0_i32_54 = arith.constant 0 : i32
    %155 = arith.cmpi slt, %153, %c0_i32_54 : i32
    %c8_i32_55 = arith.constant 8 : i32
    %156 = arith.addi %153, %c8_i32_55 : i32
    %157 = arith.select %155, %156, %153 : i32
    %c0_i32_56 = arith.constant 0 : i32
    %c8_i32_57 = arith.constant 8 : i32
    %158 = arith.maxsi %c0_i32_56, %157 : i32
    %159 = arith.minsi %c8_i32_57, %158 : i32
    %c0_i32_58 = arith.constant 0 : i32
    %160 = arith.cmpi slt, %154, %c0_i32_58 : i32
    %c8_i32_59 = arith.constant 8 : i32
    %161 = arith.addi %154, %c8_i32_59 : i32
    %162 = arith.select %160, %161, %154 : i32
    %c0_i32_60 = arith.constant 0 : i32
    %c8_i32_61 = arith.constant 8 : i32
    %163 = arith.maxsi %c0_i32_60, %162 : i32
    %164 = arith.minsi %c8_i32_61, %163 : i32
    %c160_i32_62 = arith.constant 160 : i32
    %165 = vector.broadcast %c160_i32_62 : i32 to vector<8x256xi32>
    %166 = arith.cmpi sge, %30, %165 : vector<8x256xi32>
    %c192_i32 = arith.constant 192 : i32
    %167 = vector.broadcast %c192_i32 : i32 to vector<8x256xi32>
    %168 = arith.cmpi slt, %30, %167 : vector<8x256xi32>
    %169 = arith.andi %166, %168 : vector<8x256xi1>
    %170 = vector.broadcast %159 : i32 to vector<8x256xi32>
    %171 = arith.cmpi sge, %31, %170 : vector<8x256xi32>
    %172 = arith.andi %169, %171 : vector<8x256xi1>
    %173 = vector.broadcast %164 : i32 to vector<8x256xi32>
    %174 = arith.cmpi slt, %31, %173 : vector<8x256xi32>
    %175 = arith.andi %172, %174 : vector<8x256xi1>
    %176 = arith.ori %152, %175 : vector<8x256xi1>
    %cst_63 = arith.constant -1.000000e+09 : f32
    %177 = vector.broadcast %cst_63 : f32 to vector<8x256xf32>
    %178 = arith.select %176, %29, %177 : vector<8x256xi1>, vector<8x256xf32>
    %c0_64 = arith.constant 0 : index
    %c0_65 = arith.constant 0 : index
    %179 = vector.load %arg5[%c0_64, %c0_65] : memref<8x256xf32, #tpu.memory_space<vmem>>, vector<8x256xf32>
    tpu.vector_store %arg5[%c0_64, %c0_65], %178 {strides = array<i32>} : memref<8x256xf32, #tpu.memory_space<vmem>>, vector<8x256xf32>,
    return
  }
  func.func @transform_0(%arg0: i32, %arg1: memref<12xi32, #tpu.memory_space<smem>>) -> (i32, i32) {
    %c0_i32 = arith.constant 0 : i32
    %c0_i32_0 = arith.constant 0 : i32
    %c0_i32_1 = arith.constant 0 : i32
    return %c0_i32, %c0_i32_0 : i32, i32
  }
  func.func @transform_1(%arg0: i32, %arg1: memref<12xi32, #tpu.memory_space<smem>>) -> (i32, i32) {
    %c0_i32 = arith.constant 0 : i32
    %c0_i32_0 = arith.constant 0 : i32
    %c0_i32_1 = arith.constant 0 : i32
    return %c0_i32, %c0_i32_0 : i32, i32
  }
  func.func @transform_2(%arg0: i32, %arg1: memref<12xi32, #tpu.memory_space<smem>>) -> (i32, i32) {
    %c0_i32 = arith.constant 0 : i32
    %c0_i32_0 = arith.constant 0 : i32
    %c0_i32_1 = arith.constant 0 : i32
    return %c0_i32, %c0_i32_0 : i32, i32
  }
  func.func @transform_3(%arg0: i32, %arg1: memref<12xi32, #tpu.memory_space<smem>>) -> (i32, i32) {
    %c0_i32 = arith.constant 0 : i32
    %c0_i32_0 = arith.constant 0 : i32
    %c0_i32_1 = arith.constant 0 : i32
    return %c0_i32, %c0_i32_0 : i32, i32
  }
}

</mosaic_0001>

<llo_original>
// kernel: tpu_custom_call.1
$region0: #{tpu_custom_call.1}
  #allocation0 [shape = 'u32[]', space=smem, size = 0x4, offset = 0x4, fixed_abs, tag = 'smem constant byte address 0x4 - core index']
  #allocation1 [shape = 'u32[144,128]{1,0:T(1,128)}', space=vmem, size = 0x12000, scoped, tag = 'internal scratch']
  #allocation2 [shape = 's32[1]{0}', space=sflag, size = 0x4, scoped, tag = 'scoped memory for tpu_custom_call.1']
  #allocation3 [shape = 'u8[512]{0}', space=smem, size = 0x200, scoped, tag = 'prefetched SMEM operand 0']
  %s0 = inlined_call_operand.vmem [shape: s32[12], index: 0, kind: input, shape index: {}]
  %s1 = inlined_call_operand.vmem [shape: f32[32,16], index: 1, kind: input, shape index: {}]
  %s2 = inlined_call_operand.vmem [shape: f32[64,32], index: 2, kind: input, shape index: {}]
  %s3 = inlined_call_operand.vmem [shape: f32[64,1], index: 3, kind: input, shape index: {}]
  %s4 = inlined_call_operand.hbm [shape: f32[8,256], index: 4, kind: output, shape index: {}]
  %s5 = sld [smem:[#allocation0]]
  $region22: #{tpu_custom_call.1} parent=0
    _
  %s7 = ssub.s32 1, %s5
  %s8 = scalar_select 0, %s7, %s5
  %s9 = sshll.u32 %s0, 4
  %s10 = int_to_ptr.vmem [resolvable:$true] %s9
  %12 = dma.vmem_to_smem %s10, 16, [#allocation3], [#allocation2]
  %13 = dma.done [#allocation2], 16
  %14 = sfence
  $region1: #{tpu_custom_call.1} parent=0
    #allocation4 [shape = 'u8[8192]{0}', space=vmem, size = 0x2000, scoped, tag = 'output window, operand 0, single buffered']
    #allocation5 [shape = 's32[1]{0}', space=sflag, size = 0x4, scoped, tag = 'scoped memory for tpu_custom_call.1']
    %15 = vsyncpa [#allocation5], 0
    // Predicated region
    $region2: #{tpu_custom_call.1} parent=1 // pred_check
      _
    $region3: #{tpu_custom_call.1} parent=1 // pred_check_branch
      %17 = sbr.rel (0) target = $region5
    $region4: #{tpu_custom_call.1} parent=1 // pred_region
      _
    $region5: #{tpu_custom_call.1} parent=1 // pred_fallthru
      _
    // Predicated region
    $region6: #{tpu_custom_call.1} parent=1 // pred_check
      _
    $region7: #{tpu_custom_call.1} parent=1 // pred_check_branch
      %19 = sbr.rel (0) target = $region9
    $region8: #{tpu_custom_call.1} parent=1 // pred_region
      _
    $region9: #{tpu_custom_call.1} parent=1 // pred_fallthru
      _
    // Predicated region
    $region10: #{tpu_custom_call.1} parent=1 // pred_check
      _
    $region11: #{tpu_custom_call.1} parent=1 // pred_check_branch
      %21 = sbr.rel (0) target = $region13
    $region12: #{tpu_custom_call.1} parent=1 // pred_region
      _
    $region13: #{tpu_custom_call.1} parent=1 // pred_fallthru
      _
    %v22 = vld [vmem:[%s2] sm:$0xff]
    %v23 = vld [vmem:[%s2 + $0x8] sm:$0xff]
    %v24 = vld [vmem:[%s2 + $0x10] sm:$0xff]
    %v25 = vld [vmem:[%s2 + $0x18] sm:$0xff]
    %v26 = vld [vmem:[%s2 + $0x20] sm:$0xff]
    %v27 = vld [vmem:[%s2 + $0x28] sm:$0xff]
    %v28 = vld [vmem:[%s2 + $0x30] sm:$0xff]
    %v29 = vld [vmem:[%s2 + $0x38] sm:$0xff]
    %v30 = vld [vmem:[%s1] sm:$0xff]
    %v31 = vld [vmem:[%s1 + $0x8] sm:$0xff]
    %v32 = vld [vmem:[%s1 + $0x10] sm:$0xff]
    %v33 = vld [vmem:[%s1 + $0x18] sm:$0xff]
    %v34 = vld [vmem:[%s3] sm:$0xff]
    %v35 = vld [vmem:[%s3 + $0x8] sm:$0xff]
    %v36 = vld [vmem:[%s3 + $0x10] sm:$0xff]
    %v37 = vld [vmem:[%s3 + $0x18] sm:$0xff]
    %v38 = vld [vmem:[%s3 + $0x20] sm:$0xff]
    %v39 = vld [vmem:[%s3 + $0x28] sm:$0xff]
    %v40 = vld [vmem:[%s3 + $0x30] sm:$0xff]
    %v41 = vld [vmem:[%s3 + $0x38] sm:$0xff]
    %43 = vset.pattern.permute.xlu0 0
    %44 = vperm.xlu0 %43, %v34
    %v45 = vpop.permute.xlu0 %44
    %48 = vset.pattern.permute.xlu0 0
    %49 = vperm.xlu0 %48, %v35
    %v50 = vpop.permute.xlu0 %49
    %53 = vset.pattern.permute.xlu0 0
    %54 = vperm.xlu0 %53, %v36
    %v55 = vpop.permute.xlu0 %54
    %58 = vset.pattern.permute.xlu0 0
    %59 = vperm.xlu0 %58, %v37
    %v60 = vpop.permute.xlu0 %59
    %63 = vset.pattern.permute.xlu0 0
    %64 = vperm.xlu0 %63, %v38
    %v65 = vpop.permute.xlu0 %64
    %68 = vset.pattern.permute.xlu0 0
    %69 = vperm.xlu0 %68, %v39
    %v70 = vpop.permute.xlu0 %69
    %73 = vset.pattern.permute.xlu0 0
    %74 = vperm.xlu0 %73, %v40
    %v75 = vpop.permute.xlu0 %74
    %78 = vset.pattern.permute.xlu0 0
    %79 = vperm.xlu0 %78, %v41
    %v80 = vpop.permute.xlu0 %79
    %vm82 = vcmask 261120
    %v84 = vsel %vm82, %v22, 0
    %v87 = vsel %vm82, %v23, 0
    %v90 = vsel %vm82, %v24, 0
    %v93 = vsel %vm82, %v25, 0
    %v96 = vsel %vm82, %v26, 0
    %v99 = vsel %vm82, %v27, 0
    %v102 = vsel %vm82, %v28, 0
    %v105 = vsel %vm82, %v29, 0
    %107 = vmatprep.subr.mxu0 0.0
    %108 = vmatpush1.msra.mxu0 0.0
    %109 = vmatprep.subr.mxu0 0.0
    %110 = vmatpush1.msra.mxu0 0.0
    %111 = vmatprep.subr.mxu0 0.0
    %112 = vmatpush1.msra.mxu0 0.0
    %113 = vmatprep.subr.mxu0 0.0
    %114 = vmatpush1.msra.mxu0 0.0
    %115 = vmatprep.subr.mxu0 0.0
    %116 = vmatpush1.msra.mxu0 0.0
    %117 = vmatprep.subr.mxu0 0.0
    %118 = vmatpush1.msra.mxu0 0.0
    %119 = vmatprep.subr.mxu0 0.0
    %120 = vmatpush1.msra.mxu0 0.0
    %121 = vmatprep.subr.mxu0 0.0
    %122 = vmatpush1.msra.mxu0 0.0
    %123 = vmatprep.subr.mxu0 0.0
    %124 = vmatpush1.msra.mxu0 0.0
    %125 = vmatprep.subr.mxu0 0.0
    %126 = vmatpush1.msra.mxu0 0.0
    %127 = vmatprep.subr.mxu0 0.0
    %128 = vmatpush1.msra.mxu0 0.0
    %129 = vmatprep.subr.mxu0 0.0
    %130 = vmatpush1.msra.mxu0 0.0
    %131 = vmatprep.subr.mxu0 0.0
    %132 = vmatpush1.msra.mxu0 %v33
    %133 = vmatprep.subr.mxu0 0.0
    %134 = vmatpush1.msra.mxu0 %v32
    %135 = vmatprep.subr.mxu0 0.0
    %136 = vmatpush1.msra.mxu0 %v31
    %137 = vmatprep.subr.mxu0 0.0
    %138 = vmatpush1.msra.mxu0 %v30
    %139 = vmatprep.subr.mxu0 0.0
    %140 = vmatpush2.msra.mxu0 0.0
    %141 = vmatprep.subr.mxu0 0.0
    %142 = vmatpush2.msra.mxu0 0.0
    %143 = vmatprep.subr.mxu0 0.0
    %144 = vmatpush2.msra.mxu0 0.0
    %145 = vmatprep.subr.mxu0 0.0
    %146 = vmatpush2.msra.mxu0 0.0
    %147 = vmatprep.subr.mxu0 0.0
    %148 = vmatpush2.msra.mxu0 0.0
    %149 = vmatprep.subr.mxu0 0.0
    %150 = vmatpush2.msra.mxu0 0.0
    %151 = vmatprep.subr.mxu0 0.0
    %152 = vmatpush2.msra.mxu0 0.0
    %153 = vmatprep.subr.mxu0 0.0
    %154 = vmatpush2.msra.mxu0 0.0
    %155 = vmatprep.subr.mxu0 0.0
    %156 = vmatpush2.msra.mxu0 0.0
    %157 = vmatprep.subr.mxu0 0.0
    %158 = vmatpush2.msra.mxu0 0.0
    %159 = vmatprep.subr.mxu0 0.0
    %160 = vmatpush2.msra.mxu0 0.0
    %161 = vmatprep.subr.mxu0 0.0
    %162 = vmatpush2.msra.mxu0 0.0
    %163 = vmatprep.subr.mxu0 0.0
    %164 = vmatpush2.msra.mxu0 0.0
    %165 = vmatprep.subr.mxu0 0.0
    %166 = vmatpush2.msra.mxu0 0.0
    %167 = vmatprep.subr.mxu0 0.0
    %168 = vmatpush2.msra.mxu0 0.0
    %169 = vmatprep.subr.mxu0 0.0
    %170 = vmatpush2.msra.mxu0 0.0
    %171 = vmatprep.mubr.f32.mxu0 0.0
    %172 = vmatmul.mubr.f32.gmra.mxu0 %v84
    %v173 = vpop.f32.mrf.mxu0
    %v174 = vadd.f32 %v45, %v173
    %v175 = vpop.f32.mrf.mxu0
    %176 = vmatprep.mubr.f32.mxu0 0.0
    %177 = vmatmul.mubr.f32.gmra.mxu0 %v87
    %v178 = vpop.f32.mrf.mxu0
    %v179 = vadd.f32 %v50, %v178
    %v180 = vpop.f32.mrf.mxu0
    %181 = vmatprep.mubr.f32.mxu0 0.0
    %182 = vmatmul.mubr.f32.gmra.mxu0 %v90
    %v183 = vpop.f32.mrf.mxu0
    %v184 = vadd.f32 %v55, %v183
    %v185 = vpop.f32.mrf.mxu0
    %186 = vmatprep.mubr.f32.mxu0 0.0
    %187 = vmatmul.mubr.f32.gmra.mxu0 %v93
    %v188 = vpop.f32.mrf.mxu0
    %v189 = vadd.f32 %v60, %v188
    %v190 = vpop.f32.mrf.mxu0
    %191 = vmatprep.mubr.f32.mxu0 0.0
    %192 = vmatmul.mubr.f32.gmra.mxu0 %v96
    %v193 = vpop.f32.mrf.mxu0
    %v194 = vadd.f32 %v65, %v193
    %v195 = vpop.f32.mrf.mxu0
    %196 = vmatprep.mubr.f32.mxu0 0.0
    %197 = vmatmul.mubr.f32.gmra.mxu0 %v99
    %v198 = vpop.f32.mrf.mxu0
    %v199 = vadd.f32 %v70, %v198
    %v200 = vpop.f32.mrf.mxu0
    %201 = vmatprep.mubr.f32.mxu0 0.0
    %202 = vmatmul.mubr.f32.gmra.mxu0 %v102
    %v203 = vpop.f32.mrf.mxu0
    %v204 = vadd.f32 %v75, %v203
    %v205 = vpop.f32.mrf.mxu0
    %206 = vmatprep.mubr.f32.mxu0 0.0
    %207 = vmatmul.mubr.f32.gmra.mxu0 %v105
    %v208 = vpop.f32.mrf.mxu0
    %v209 = vadd.f32 %v80, %v208
    %v210 = vpop.f32.mrf.mxu0
    %211 = vdwg.mxu0
    %212 = vxpose.xlu0.b32.start [1/16] %v174, 128
    %213 = vxpose.xlu0.b32.cont [2/16] 0.0, 128
    %214 = vxpose.xlu0.b32.cont [3/16] 0.0, 128
    %215 = vxpose.xlu0.b32.cont [4/16] 0.0, 128
    %216 = vxpose.xlu0.b32.cont [5/16] 0.0, 128
    %217 = vxpose.xlu0.b32.cont [6/16] 0.0, 128
    %218 = vxpose.xlu0.b32.cont [7/16] 0.0, 128
    %219 = vxpose.xlu0.b32.cont [8/16] 0.0, 128
    %220 = vxpose.xlu0.b32.cont [9/16] 0.0, 128
    %221 = vxpose.xlu0.b32.cont [10/16] 0.0, 128
    %222 = vxpose.xlu0.b32.cont [11/16] 0.0, 128
    %223 = vxpose.xlu0.b32.cont [12/16] 0.0, 128
    %224 = vxpose.xlu0.b32.cont [13/16] 0.0, 128
    %225 = vxpose.xlu0.b32.cont [14/16] 0.0, 128
    %226 = vxpose.xlu0.b32.cont [15/16] 0.0, 128
    %227 = vxpose.xlu0.b32.end [16/16] 0.0, 128
    %v228 = vpop.trf.xlu0
    %v229 = vpop.trf.xlu0
    %v230 = vpop.trf.xlu0
    %v231 = vpop.trf.xlu0
    %v232 = vpop.trf.xlu0
    %v233 = vpop.trf.xlu0
    %v234 = vpop.trf.xlu0
    %v235 = vpop.trf.xlu0
    %v236 = vpop.trf.xlu0
    %v237 = vpop.trf.xlu0
    %v238 = vpop.trf.xlu0
    %v239 = vpop.trf.xlu0
    %v240 = vpop.trf.xlu0
    %v241 = vpop.trf.xlu0
    %v242 = vpop.trf.xlu0
    %v243 = vpop.trf.xlu0
    %vm244 = vcmask 64512
    %v246 = vsel %vm244, %v228, 0
    %v249 = vsel %vm244, %v229, 0
    %251 = vmatprep.subr.mxu0 0.0
    %252 = vmatpush1.msra.mxu0 0.0
    %253 = vmatprep.subr.mxu0 0.0
    %254 = vmatpush1.msra.mxu0 0.0
    %255 = vmatprep.subr.mxu0 0.0
    %256 = vmatpush1.msra.mxu0 0.0
    %257 = vmatprep.subr.mxu0 0.0
    %258 = vmatpush1.msra.mxu0 0.0
    %259 = vmatprep.subr.mxu0 0.0
    %260 = vmatpush1.msra.mxu0 0.0
    %261 = vmatprep.subr.mxu0 0.0
    %262 = vmatpush1.msra.mxu0 0.0
    %263 = vmatprep.subr.mxu0 0.0
    %264 = vmatpush1.msra.mxu0 0.0
    %265 = vmatprep.subr.mxu0 0.0
    %266 = vmatpush1.msra.mxu0 0.0
    %267 = vmatprep.subr.mxu0 0.0
    %268 = vmatpush1.msra.mxu0 0.0
    %269 = vmatprep.subr.mxu0 0.0
    %270 = vmatpush1.msra.mxu0 0.0
    %271 = vmatprep.subr.mxu0 0.0
    %272 = vmatpush1.msra.mxu0 0.0
    %273 = vmatprep.subr.mxu0 0.0
    %274 = vmatpush1.msra.mxu0 0.0
    %275 = vmatprep.subr.mxu0 0.0
    %276 = vmatpush1.msra.mxu0 0.0
    %277 = vmatprep.subr.mxu0 0.0
    %278 = vmatpush1.msra.mxu0 0.0
    %279 = vmatprep.subr.mxu0 0.0
    %280 = vmatpush1.msra.mxu0 0.0
    %281 = vmatprep.subr.mxu0 0.0
    %282 = vmatpush1.msra.mxu0 %v194
    %283 = vmatprep.subr.mxu0 0.0
    %284 = vmatpush2.msra.mxu0 0.0
    %285 = vmatprep.subr.mxu0 0.0
    %286 = vmatpush2.msra.mxu0 0.0
    %287 = vmatprep.subr.mxu0 0.0
    %288 = vmatpush2.msra.mxu0 0.0
    %289 = vmatprep.subr.mxu0 0.0
    %290 = vmatpush2.msra.mxu0 0.0
    %291 = vmatprep.subr.mxu0 0.0
    %292 = vmatpush2.msra.mxu0 0.0
    %293 = vmatprep.subr.mxu0 0.0
    %294 = vmatpush2.msra.mxu0 0.0
    %295 = vmatprep.subr.mxu0 0.0
    %296 = vmatpush2.msra.mxu0 0.0
    %297 = vmatprep.subr.mxu0 0.0
    %298 = vmatpush2.msra.mxu0 0.0
    %299 = vmatprep.subr.mxu0 0.0
    %300 = vmatpush2.msra.mxu0 0.0
    %301 = vmatprep.subr.mxu0 0.0
    %302 = vmatpush2.msra.mxu0 0.0
    %303 = vmatprep.subr.mxu0 0.0
    %304 = vmatpush2.msra.mxu0 0.0
    %305 = vmatprep.subr.mxu0 0.0
    %306 = vmatpush2.msra.mxu0 0.0
    %307 = vmatprep.subr.mxu0 0.0
    %308 = vmatpush2.msra.mxu0 0.0
    %309 = vmatprep.subr.mxu0 0.0
    %310 = vmatpush2.msra.mxu0 0.0
    %311 = vmatprep.subr.mxu0 0.0
    %312 = vmatpush2.msra.mxu0 0.0
    %313 = vmatprep.subr.mxu0 0.0
    %314 = vmatpush2.msra.mxu0 0.0
    %315 = vmatprep.mubr.f32.mxu0 0.0
    %316 = vmatmul.mubr.f32.gmra.mxu0 %v246
    %v317 = vpop.f32.mrf.mxu0
    %v318 = vadd.f32 0.0, %v317
    %v319 = vpop.f32.mrf.mxu0
    %320 = vmatprep.mubr.f32.mxu0 0.0
    %321 = vmatmul.mubr.f32.gmra.mxu0 %v249
    %v322 = vpop.f32.mrf.mxu0
    %v323 = vadd.f32 0.0, %v322
    %v324 = vpop.f32.mrf.mxu0
    %325 = vdwg.mxu0
    %326 = vxpose.xlu0.b32.start [1/16] %v179, 128
    %327 = vxpose.xlu0.b32.cont [2/16] 0.0, 128
    %328 = vxpose.xlu0.b32.cont [3/16] 0.0, 128
    %329 = vxpose.xlu0.b32.cont [4/16] 0.0, 128
    %330 = vxpose.xlu0.b32.cont [5/16] 0.0, 128
    %331 = vxpose.xlu0.b32.cont [6/16] 0.0, 128
    %332 = vxpose.xlu0.b32.cont [7/16] 0.0, 128
    %333 = vxpose.xlu0.b32.cont [8/16] 0.0, 128
    %334 = vxpose.xlu0.b32.cont [9/16] 0.0, 128
    %335 = vxpose.xlu0.b32.cont [10/16] 0.0, 128
    %336 = vxpose.xlu0.b32.cont [11/16] 0.0, 128
    %337 = vxpose.xlu0.b32.cont [12/16] 0.0, 128
    %338 = vxpose.xlu0.b32.cont [13/16] 0.0, 128
    %339 = vxpose.xlu0.b32.cont [14/16] 0.0, 128
    %340 = vxpose.xlu0.b32.cont [15/16] 0.0, 128
    %341 = vxpose.xlu0.b32.end [16/16] 0.0, 128
    %v342 = vpop.trf.xlu0
    %v343 = vpop.trf.xlu0
    %v344 = vpop.trf.xlu0
    %v345 = vpop.trf.xlu0
    %v346 = vpop.trf.xlu0
    %v347 = vpop.trf.xlu0
    %v348 = vpop.trf.xlu0
    %v349 = vpop.trf.xlu0
    %v350 = vpop.trf.xlu0
    %v351 = vpop.trf.xlu0
    %v352 = vpop.trf.xlu0
    %v353 = vpop.trf.xlu0
    %v354 = vpop.trf.xlu0
    %v355 = vpop.trf.xlu0
    %v356 = vpop.trf.xlu0
    %v357 = vpop.trf.xlu0
    %v359 = vsel %vm244, %v342, 0
    %v362 = vsel %vm244, %v343, 0
    %364 = vmatprep.subr.mxu0 0.0
    %365 = vmatpush1.msra.mxu0 0.0
    %366 = vmatprep.subr.mxu0 0.0
    %367 = vmatpush1.msra.mxu0 0.0
    %368 = vmatprep.subr.mxu0 0.0
    %369 = vmatpush1.msra.mxu0 0.0
    %370 = vmatprep.subr.mxu0 0.0
    %371 = vmatpush1.msra.mxu0 0.0
    %372 = vmatprep.subr.mxu0 0.0
    %373 = vmatpush1.msra.mxu0 0.0
    %374 = vmatprep.subr.mxu0 0.0
    %375 = vmatpush1.msra.mxu0 0.0
    %376 = vmatprep.subr.mxu0 0.0
    %377 = vmatpush1.msra.mxu0 0.0
    %378 = vmatprep.subr.mxu0 0.0
    %379 = vmatpush1.msra.mxu0 0.0
    %380 = vmatprep.subr.mxu0 0.0
    %381 = vmatpush1.msra.mxu0 0.0
    %382 = vmatprep.subr.mxu0 0.0
    %383 = vmatpush1.msra.mxu0 0.0
    %384 = vmatprep.subr.mxu0 0.0
    %385 = vmatpush1.msra.mxu0 0.0
    %386 = vmatprep.subr.mxu0 0.0
    %387 = vmatpush1.msra.mxu0 0.0
    %388 = vmatprep.subr.mxu0 0.0
    %389 = vmatpush1.msra.mxu0 0.0
    %390 = vmatprep.subr.mxu0 0.0
    %391 = vmatpush1.msra.mxu0 0.0
    %392 = vmatprep.subr.mxu0 0.0
    %393 = vmatpush1.msra.mxu0 0.0
    %394 = vmatprep.subr.mxu0 0.0
    %395 = vmatpush1.msra.mxu0 %v199
    %396 = vmatprep.subr.mxu0 0.0
    %397 = vmatpush2.msra.mxu0 0.0
    %398 = vmatprep.subr.mxu0 0.0
    %399 = vmatpush2.msra.mxu0 0.0
    %400 = vmatprep.subr.mxu0 0.0
    %401 = vmatpush2.msra.mxu0 0.0
    %402 = vmatprep.subr.mxu0 0.0
    %403 = vmatpush2.msra.mxu0 0.0
    %404 = vmatprep.subr.mxu0 0.0
    %405 = vmatpush2.msra.mxu0 0.0
    %406 = vmatprep.subr.mxu0 0.0
    %407 = vmatpush2.msra.mxu0 0.0
    %408 = vmatprep.subr.mxu0 0.0
    %409 = vmatpush2.msra.mxu0 0.0
    %410 = vmatprep.subr.mxu0 0.0
    %411 = vmatpush2.msra.mxu0 0.0
    %412 = vmatprep.subr.mxu0 0.0
    %413 = vmatpush2.msra.mxu0 0.0
    %414 = vmatprep.subr.mxu0 0.0
    %415 = vmatpush2.msra.mxu0 0.0
    %416 = vmatprep.subr.mxu0 0.0
    %417 = vmatpush2.msra.mxu0 0.0
    %418 = vmatprep.subr.mxu0 0.0
    %419 = vmatpush2.msra.mxu0 0.0
    %420 = vmatprep.subr.mxu0 0.0
    %421 = vmatpush2.msra.mxu0 0.0
    %422 = vmatprep.subr.mxu0 0.0
    %423 = vmatpush2.msra.mxu0 0.0
    %424 = vmatprep.subr.mxu0 0.0
    %425 = vmatpush2.msra.mxu0 0.0
    %426 = vmatprep.subr.mxu0 0.0
    %427 = vmatpush2.msra.mxu0 0.0
    %428 = vmatprep.mubr.f32.mxu0 0.0
    %429 = vmatmul.mubr.f32.gmra.mxu0 %v359
    %v430 = vpop.f32.mrf.mxu0
    %v431 = vadd.f32 0.0, %v430
    %v432 = vpop.f32.mrf.mxu0
    %433 = vmatprep.mubr.f32.mxu0 0.0
    %434 = vmatmul.mubr.f32.gmra.mxu0 %v362
    %v435 = vpop.f32.mrf.mxu0
    %v436 = vadd.f32 0.0, %v435
    %v437 = vpop.f32.mrf.mxu0
    %438 = vdwg.mxu0
    %439 = vxpose.xlu0.b32.start [1/16] %v184, 128
    %440 = vxpose.xlu0.b32.cont [2/16] 0.0, 128
    %441 = vxpose.xlu0.b32.cont [3/16] 0.0, 128
    %442 = vxpose.xlu0.b32.cont [4/16] 0.0, 128
    %443 = vxpose.xlu0.b32.cont [5/16] 0.0, 128
    %444 = vxpose.xlu0.b32.cont [6/16] 0.0, 128
    %445 = vxpose.xlu0.b32.cont [7/16] 0.0, 128
    %446 = vxpose.xlu0.b32.cont [8/16] 0.0, 128
    %447 = vxpose.xlu0.b32.cont [9/16] 0.0, 128
    %448 = vxpose.xlu0.b32.cont [10/16] 0.0, 128
    %449 = vxpose.xlu0.b32.cont [11/16] 0.0, 128
    %450 = vxpose.xlu0.b32.cont [12/16] 0.0, 128
    %451 = vxpose.xlu0.b32.cont [13/16] 0.0, 128
    %452 = vxpose.xlu0.b32.cont [14/16] 0.0, 128
    %453 = vxpose.xlu0.b32.cont [15/16] 0.0, 128
    %454 = vxpose.xlu0.b32.end [16/16] 0.0, 128
    %v455 = vpop.trf.xlu0
    %v456 = vpop.trf.xlu0
    %v457 = vpop.trf.xlu0
    %v458 = vpop.trf.xlu0
    %v459 = vpop.trf.xlu0
    %v460 = vpop.trf.xlu0
    %v461 = vpop.trf.xlu0
    %v462 = vpop.trf.xlu0
    %v463 = vpop.trf.xlu0
    %v464 = vpop.trf.xlu0
    %v465 = vpop.trf.xlu0
    %v466 = vpop.trf.xlu0
    %v467 = vpop.trf.xlu0
    %v468 = vpop.trf.xlu0
    %v469 = vpop.trf.xlu0
    %v470 = vpop.trf.xlu0
    %v472 = vsel %vm244, %v455, 0
    %v475 = vsel %vm244, %v456, 0
    %477 = vmatprep.subr.mxu0 0.0
    %478 = vmatpush1.msra.mxu0 0.0
    %479 = vmatprep.subr.mxu0 0.0
    %480 = vmatpush1.msra.mxu0 0.0
    %481 = vmatprep.subr.mxu0 0.0
    %482 = vmatpush1.msra.mxu0 0.0
    %483 = vmatprep.subr.mxu0 0.0
    %484 = vmatpush1.msra.mxu0 0.0
    %485 = vmatprep.subr.mxu0 0.0
    %486 = vmatpush1.msra.mxu0 0.0
    %487 = vmatprep.subr.mxu0 0.0
    %488 = vmatpush1.msra.mxu0 0.0
    %489 = vmatprep.subr.mxu0 0.0
    %490 = vmatpush1.msra.mxu0 0.0
    %491 = vmatprep.subr.mxu0 0.0
    %492 = vmatpush1.msra.mxu0 0.0
    %493 = vmatprep.subr.mxu0 0.0
    %494 = vmatpush1.msra.mxu0 0.0
    %495 = vmatprep.subr.mxu0 0.0
    %496 = vmatpush1.msra.mxu0 0.0
    %497 = vmatprep.subr.mxu0 0.0
    %498 = vmatpush1.msra.mxu0 0.0
    %499 = vmatprep.subr.mxu0 0.0
    %500 = vmatpush1.msra.mxu0 0.0
    %501 = vmatprep.subr.mxu0 0.0
    %502 = vmatpush1.msra.mxu0 0.0
    %503 = vmatprep.subr.mxu0 0.0
    %504 = vmatpush1.msra.mxu0 0.0
    %505 = vmatprep.subr.mxu0 0.0
    %506 = vmatpush1.msra.mxu0 0.0
    %507 = vmatprep.subr.mxu0 0.0
    %508 = vmatpush1.msra.mxu0 %v204
    %509 = vmatprep.subr.mxu0 0.0
    %510 = vmatpush2.msra.mxu0 0.0
    %511 = vmatprep.subr.mxu0 0.0
    %512 = vmatpush2.msra.mxu0 0.0
    %513 = vmatprep.subr.mxu0 0.0
    %514 = vmatpush2.msra.mxu0 0.0
    %515 = vmatprep.subr.mxu0 0.0
    %516 = vmatpush2.msra.mxu0 0.0
    %517 = vmatprep.subr.mxu0 0.0
    %518 = vmatpush2.msra.mxu0 0.0
    %519 = vmatprep.subr.mxu0 0.0
    %520 = vmatpush2.msra.mxu0 0.0
    %521 = vmatprep.subr.mxu0 0.0
    %522 = vmatpush2.msra.mxu0 0.0
    %523 = vmatprep.subr.mxu0 0.0
    %524 = vmatpush2.msra.mxu0 0.0
    %525 = vmatprep.subr.mxu0 0.0
    %526 = vmatpush2.msra.mxu0 0.0
    %527 = vmatprep.subr.mxu0 0.0
    %528 = vmatpush2.msra.mxu0 0.0
    %529 = vmatprep.subr.mxu0 0.0
    %530 = vmatpush2.msra.mxu0 0.0
    %531 = vmatprep.subr.mxu0 0.0
    %532 = vmatpush2.msra.mxu0 0.0
    %533 = vmatprep.subr.mxu0 0.0
    %534 = vmatpush2.msra.mxu0 0.0
    %535 = vmatprep.subr.mxu0 0.0
    %536 = vmatpush2.msra.mxu0 0.0
    %537 = vmatprep.subr.mxu0 0.0
    %538 = vmatpush2.msra.mxu0 0.0
    %539 = vmatprep.subr.mxu0 0.0
    %540 = vmatpush2.msra.mxu0 0.0
    %541 = vmatprep.mubr.f32.mxu0 0.0
    %542 = vmatmul.mubr.f32.gmra.mxu0 %v472
    %v543 = vpop.f32.mrf.mxu0
    %v544 = vadd.f32 0.0, %v543
    %v545 = vpop.f32.mrf.mxu0
    %546 = vmatprep.mubr.f32.mxu0 0.0
    %547 = vmatmul.mubr.f32.gmra.mxu0 %v475
    %v548 = vpop.f32.mrf.mxu0
    %v549 = vadd.f32 0.0, %v548
    %v550 = vpop.f32.mrf.mxu0
    %551 = vdwg.mxu0
    %552 = vxpose.xlu0.b32.start [1/16] %v189, 128
    %553 = vxpose.xlu0.b32.cont [2/16] 0.0, 128
    %554 = vxpose.xlu0.b32.cont [3/16] 0.0, 128
    %555 = vxpose.xlu0.b32.cont [4/16] 0.0, 128
    %556 = vxpose.xlu0.b32.cont [5/16] 0.0, 128
    %557 = vxpose.xlu0.b32.cont [6/16] 0.0, 128
    %558 = vxpose.xlu0.b32.cont [7/16] 0.0, 128
    %559 = vxpose.xlu0.b32.cont [8/16] 0.0, 128
    %560 = vxpose.xlu0.b32.cont [9/16] 0.0, 128
    %561 = vxpose.xlu0.b32.cont [10/16] 0.0, 128
    %562 = vxpose.xlu0.b32.cont [11/16] 0.0, 128
    %563 = vxpose.xlu0.b32.cont [12/16] 0.0, 128
    %564 = vxpose.xlu0.b32.cont [13/16] 0.0, 128
    %565 = vxpose.xlu0.b32.cont [14/16] 0.0, 128
    %566 = vxpose.xlu0.b32.cont [15/16] 0.0, 128
    %567 = vxpose.xlu0.b32.end [16/16] 0.0, 128
    %v568 = vpop.trf.xlu0
    %v569 = vpop.trf.xlu0
    %v570 = vpop.trf.xlu0
    %v571 = vpop.trf.xlu0
    %v572 = vpop.trf.xlu0
    %v573 = vpop.trf.xlu0
    %v574 = vpop.trf.xlu0
    %v575 = vpop.trf.xlu0
    %v576 = vpop.trf.xlu0
    %v577 = vpop.trf.xlu0
    %v578 = vpop.trf.xlu0
    %v579 = vpop.trf.xlu0
    %v580 = vpop.trf.xlu0
    %v581 = vpop.trf.xlu0
    %v582 = vpop.trf.xlu0
    %v583 = vpop.trf.xlu0
    %v585 = vsel %vm244, %v568, 0
    %v588 = vsel %vm244, %v569, 0
    %590 = vmatprep.subr.mxu0 0.0
    %591 = vmatpush1.msra.mxu0 0.0
    %592 = vmatprep.subr.mxu0 0.0
    %593 = vmatpush1.msra.mxu0 0.0
    %594 = vmatprep.subr.mxu0 0.0
    %595 = vmatpush1.msra.mxu0 0.0
    %596 = vmatprep.subr.mxu0 0.0
    %597 = vmatpush1.msra.mxu0 0.0
    %598 = vmatprep.subr.mxu0 0.0
    %599 = vmatpush1.msra.mxu0 0.0
    %600 = vmatprep.subr.mxu0 0.0
    %601 = vmatpush1.msra.mxu0 0.0
    %602 = vmatprep.subr.mxu0 0.0
    %603 = vmatpush1.msra.mxu0 0.0
    %604 = vmatprep.subr.mxu0 0.0
    %605 = vmatpush1.msra.mxu0 0.0
    %606 = vmatprep.subr.mxu0 0.0
    %607 = vmatpush1.msra.mxu0 0.0
    %608 = vmatprep.subr.mxu0 0.0
    %609 = vmatpush1.msra.mxu0 0.0
    %610 = vmatprep.subr.mxu0 0.0
    %611 = vmatpush1.msra.mxu0 0.0
    %612 = vmatprep.subr.mxu0 0.0
    %613 = vmatpush1.msra.mxu0 0.0
    %614 = vmatprep.subr.mxu0 0.0
    %615 = vmatpush1.msra.mxu0 0.0
    %616 = vmatprep.subr.mxu0 0.0
    %617 = vmatpush1.msra.mxu0 0.0
    %618 = vmatprep.subr.mxu0 0.0
    %619 = vmatpush1.msra.mxu0 0.0
    %620 = vmatprep.subr.mxu0 0.0
    %621 = vmatpush1.msra.mxu0 %v209
    %622 = vmatprep.subr.mxu0 0.0
    %623 = vmatpush2.msra.mxu0 0.0
    %624 = vmatprep.subr.mxu0 0.0
    %625 = vmatpush2.msra.mxu0 0.0
    %626 = vmatprep.subr.mxu0 0.0
    %627 = vmatpush2.msra.mxu0 0.0
    %628 = vmatprep.subr.mxu0 0.0
    %629 = vmatpush2.msra.mxu0 0.0
    %630 = vmatprep.subr.mxu0 0.0
    %631 = vmatpush2.msra.mxu0 0.0
    %632 = vmatprep.subr.mxu0 0.0
    %633 = vmatpush2.msra.mxu0 0.0
    %634 = vmatprep.subr.mxu0 0.0
    %635 = vmatpush2.msra.mxu0 0.0
    %636 = vmatprep.subr.mxu0 0.0
    %637 = vmatpush2.msra.mxu0 0.0
    %638 = vmatprep.subr.mxu0 0.0
    %639 = vmatpush2.msra.mxu0 0.0
    %640 = vmatprep.subr.mxu0 0.0
    %641 = vmatpush2.msra.mxu0 0.0
    %642 = vmatprep.subr.mxu0 0.0
    %643 = vmatpush2.msra.mxu0 0.0
    %644 = vmatprep.subr.mxu0 0.0
    %645 = vmatpush2.msra.mxu0 0.0
    %646 = vmatprep.subr.mxu0 0.0
    %647 = vmatpush2.msra.mxu0 0.0
    %648 = vmatprep.subr.mxu0 0.0
    %649 = vmatpush2.msra.mxu0 0.0
    %650 = vmatprep.subr.mxu0 0.0
    %651 = vmatpush2.msra.mxu0 0.0
    %652 = vmatprep.subr.mxu0 0.0
    %653 = vmatpush2.msra.mxu0 0.0
    %654 = vmatprep.mubr.f32.mxu0 0.0
    %655 = vmatmul.mubr.f32.gmra.mxu0 %v585
    %v656 = vpop.f32.mrf.mxu0
    %v657 = vadd.f32 0.0, %v656
    %v658 = vpop.f32.mrf.mxu0
    %659 = vmatprep.mubr.f32.mxu0 0.0
    %660 = vmatmul.mubr.f32.gmra.mxu0 %v588
    %v661 = vpop.f32.mrf.mxu0
    %v662 = vadd.f32 0.0, %v661
    %v663 = vpop.f32.mrf.mxu0
    %664 = vdwg.mxu0
    %666 = vrot.lane.b32.xlu0 %v431, 8
    %v667 = vpop.permute.xlu0 %666
    %670 = vrot.lane.b32.xlu0 %v544, 16
    %v671 = vpop.permute.xlu0 %670
    %674 = vrot.lane.b32.xlu0 %v657, 24
    %v675 = vpop.permute.xlu0 %674
    %v677 = vsel %vm244, %v318, %v667
    %vm678 = vcmask 130048
    %v679 = vsel %vm678, %v677, %v671
    %vm680 = vcmask 195584
    %v681 = vsel %vm680, %v679, %v675
    %683 = vrot.lane.b32.xlu0 %v323, 120
    %v684 = vpop.permute.xlu0 %683
    %687 = vrot.lane.b32.xlu0 %v549, 8
    %v688 = vpop.permute.xlu0 %687
    %691 = vrot.lane.b32.xlu0 %v662, 16
    %v692 = vpop.permute.xlu0 %691
    %v694 = vsel %vm244, %v684, %v436
    %v695 = vsel %vm678, %v694, %v688
    %v696 = vsel %vm680, %v695, %v692
    %698 = vrot.lane.b32.xlu0 %v681, 32
    %v699 = vpop.permute.xlu0 %698
    %701 = vrot.lane.b32.xlu0 %v681, 64
    %v702 = vpop.permute.xlu0 %701
    %705 = vrot.lane.b32.xlu0 %v696, 96
    %v706 = vpop.permute.xlu0 %705
    %708 = vrot.lane.b32.xlu0 %v696, 32
    %v709 = vpop.permute.xlu0 %708
    %v711 = vsel %vm82, %v681, %v699
    %vm712 = vcmask 523264
    %v713 = vsel %vm712, %v711, %v702
    %vm714 = vcmask 785408
    %v715 = vsel %vm714, %v713, %v706
    %v716 = vsel %vm82, %v696, %v709
    %v717 = vsel %vm712, %v716, 0.0
    %v718 = vlaneseq
    %v719 = vand.u32 %v718, 127
    %v720 = vadd.s32 %v719, 128
    %v721 = vlaneseq
    %v722 = vshrl.u32 %v721, 7
    %s723 = sld [smem:[#allocation3]]
    %s724 = sld [smem:[#allocation3 + $0x1]]
    %p725 = scmp.lt.s32.totalorder %s723, 0
    %s726 = sadd.s32 %s723, 8
    %s727 = scalar_select %p725, %s726, %s723
    %p728 = scmp.gt.s32.totalorder %s727, 0
    %s729 = scalar_select %p728, %s727, 0
    %p730 = scmp.lt.s32.totalorder %s729, 8
    %s731 = scalar_select %p730, %s729, 8
    %p732 = scmp.lt.s32.totalorder %s724, 0
    %s733 = sadd.s32 %s724, 8
    %s734 = scalar_select %p732, %s733, %s724
    %p735 = scmp.gt.s32.totalorder %s734, 0
    %s736 = scalar_select %p735, %s734, 0
    %p737 = scmp.lt.s32.totalorder %s736, 8
    %s738 = scalar_select %p737, %s736, 8
    %vm739 = vcmp.ge.s32.totalorder %v719, 0
    %vm740 = vcmp.ge.s32.totalorder %v720, 0
    %vm741 = vcmp.lt.s32.totalorder %v719, 32
    %vm742 = vcmp.lt.s32.totalorder %v720, 32
    %vm743 = vmand %vm739, %vm741
    %vm744 = vmand %vm740, %vm742
    %v745 = vstv %s731
    %vm746 = vcmp.ge.s32.totalorder %v722, %v745
    %vm747 = vmand %vm743, %vm746
    %vm748 = vmand %vm744, %vm746
    %v749 = vstv %s738
    %vm750 = vcmp.lt.s32.totalorder %v722, %v749
    %vm751 = vmand %vm747, %vm750
    %vm752 = vmand %vm748, %vm750
    %s753 = sld [smem:[#allocation3 + $0x2]]
    %s754 = sld [smem:[#allocation3 + $0x3]]
    %p755 = scmp.lt.s32.totalorder %s753, 0
    %s756 = sadd.s32 %s753, 8
    %s757 = scalar_select %p755, %s756, %s753
    %p758 = scmp.gt.s32.totalorder %s757, 0
    %s759 = scalar_select %p758, %s757, 0
    %p760 = scmp.lt.s32.totalorder %s759, 8
    %s761 = scalar_select %p760, %s759, 8
    %p762 = scmp.lt.s32.totalorder %s754, 0
    %s763 = sadd.s32 %s754, 8
    %s764 = scalar_select %p762, %s763, %s754
    %p765 = scmp.gt.s32.totalorder %s764, 0
    %s766 = scalar_select %p765, %s764, 0
    %p767 = scmp.lt.s32.totalorder %s766, 8
    %s768 = scalar_select %p767, %s766, 8
    %vm769 = vcmp.ge.s32.totalorder %v719, 32
    %vm770 = vcmp.ge.s32.totalorder %v720, 32
    %vm771 = vcmp.lt.s32.totalorder %v719, 64
    %vm772 = vcmp.lt.s32.totalorder %v720, 64
    %vm773 = vmand %vm769, %vm771
    %vm774 = vmand %vm770, %vm772
    %v775 = vstv %s761
    %vm776 = vcmp.ge.s32.totalorder %v722, %v775
    %vm777 = vmand %vm773, %vm776
    %vm778 = vmand %vm774, %vm776
    %v779 = vstv %s768
    %vm780 = vcmp.lt.s32.totalorder %v722, %v779
    %vm781 = vmand %vm777, %vm780
    %vm782 = vmand %vm778, %vm780
    %vm783 = vmor %vm751, %vm781
    %vm784 = vmor %vm752, %vm782
    %s785 = sld [smem:[#allocation3 + $0x4]]
    %s786 = sld [smem:[#allocation3 + $0x5]]
    %p787 = scmp.lt.s32.totalorder %s785, 0
    %s788 = sadd.s32 %s785, 8
    %s789 = scalar_select %p787, %s788, %s785
    %p790 = scmp.gt.s32.totalorder %s789, 0
    %s791 = scalar_select %p790, %s789, 0
    %p792 = scmp.lt.s32.totalorder %s791, 8
    %s793 = scalar_select %p792, %s791, 8
    %p794 = scmp.lt.s32.totalorder %s786, 0
    %s795 = sadd.s32 %s786, 8
    %s796 = scalar_select %p794, %s795, %s786
    %p797 = scmp.gt.s32.totalorder %s796, 0
    %s798 = scalar_select %p797, %s796, 0
    %p799 = scmp.lt.s32.totalorder %s798, 8
    %s800 = scalar_select %p799, %s798, 8
    %vm801 = vcmp.ge.s32.totalorder %v719, 64
    %vm802 = vcmp.ge.s32.totalorder %v720, 64
    %vm803 = vcmp.lt.s32.totalorder %v719, 96
    %vm804 = vcmp.lt.s32.totalorder %v720, 96
    %vm805 = vmand %vm801, %vm803
    %vm806 = vmand %vm802, %vm804
    %v807 = vstv %s793
    %vm808 = vcmp.ge.s32.totalorder %v722, %v807
    %vm809 = vmand %vm805, %vm808
    %vm810 = vmand %vm806, %vm808
    %v811 = vstv %s800
    %vm812 = vcmp.lt.s32.totalorder %v722, %v811
    %vm813 = vmand %vm809, %vm812
    %vm814 = vmand %vm810, %vm812
    %vm815 = vmor %vm783, %vm813
    %vm816 = vmor %vm784, %vm814
    %s817 = sld [smem:[#allocation3 + $0x6]]
    %s818 = sld [smem:[#allocation3 + $0x7]]
    %p819 = scmp.lt.s32.totalorder %s817, 0
    %s820 = sadd.s32 %s817, 8
    %s821 = scalar_select %p819, %s820, %s817
    %p822 = scmp.gt.s32.totalorder %s821, 0
    %s823 = scalar_select %p822, %s821, 0
    %p824 = scmp.lt.s32.totalorder %s823, 8
    %s825 = scalar_select %p824, %s823, 8
    %p826 = scmp.lt.s32.totalorder %s818, 0
    %s827 = sadd.s32 %s818, 8
    %s828 = scalar_select %p826, %s827, %s818
    %p829 = scmp.gt.s32.totalorder %s828, 0
    %s830 = scalar_select %p829, %s828, 0
    %p831 = scmp.lt.s32.totalorder %s830, 8
    %s832 = scalar_select %p831, %s830, 8
    %vm833 = vcmp.ge.s32.totalorder %v719, 96
    %vm834 = vcmp.ge.s32.totalorder %v720, 96
    %vm835 = vcmp.lt.s32.totalorder %v719, 128
    %vm836 = vcmp.lt.s32.totalorder %v720, 128
    %vm837 = vmand %vm833, %vm835
    %vm838 = vmand %vm834, %vm836
    %v839 = vstv %s825
    %vm840 = vcmp.ge.s32.totalorder %v722, %v839
    %vm841 = vmand %vm837, %vm840
    %vm842 = vmand %vm838, %vm840
    %v843 = vstv %s832
    %vm844 = vcmp.lt.s32.totalorder %v722, %v843
    %vm845 = vmand %vm841, %vm844
    %vm846 = vmand %vm842, %vm844
    %vm847 = vmor %vm815, %vm845
    %vm848 = vmor %vm816, %vm846
    %s849 = sld [smem:[#allocation3 + $0x8]]
    %s850 = sld [smem:[#allocation3 + $0x9]]
    %p851 = scmp.lt.s32.totalorder %s849, 0
    %s852 = sadd.s32 %s849, 8
    %s853 = scalar_select %p851, %s852, %s849
    %p854 = scmp.gt.s32.totalorder %s853, 0
    %s855 = scalar_select %p854, %s853, 0
    %p856 = scmp.lt.s32.totalorder %s855, 8
    %s857 = scalar_select %p856, %s855, 8
    %p858 = scmp.lt.s32.totalorder %s850, 0
    %s859 = sadd.s32 %s850, 8
    %s860 = scalar_select %p858, %s859, %s850
    %p861 = scmp.gt.s32.totalorder %s860, 0
    %s862 = scalar_select %p861, %s860, 0
    %p863 = scmp.lt.s32.totalorder %s862, 8
    %s864 = scalar_select %p863, %s862, 8
    %vm865 = vcmp.ge.s32.totalorder %v719, 128
    %vm866 = vcmp.ge.s32.totalorder %v720, 128
    %vm867 = vcmp.lt.s32.totalorder %v719, 160
    %vm868 = vcmp.lt.s32.totalorder %v720, 160
    %vm869 = vmand %vm865, %vm867
    %vm870 = vmand %vm866, %vm868
    %v871 = vstv %s857
    %vm872 = vcmp.ge.s32.totalorder %v722, %v871
    %vm873 = vmand %vm869, %vm872
    %vm874 = vmand %vm870, %vm872
    %v875 = vstv %s864
    %vm876 = vcmp.lt.s32.totalorder %v722, %v875
    %vm877 = vmand %vm873, %vm876
    %vm878 = vmand %vm874, %vm876
    %vm879 = vmor %vm847, %vm877
    %vm880 = vmor %vm848, %vm878
    %s881 = sld [smem:[#allocation3 + $0xa]]
    %s882 = sld [smem:[#allocation3 + $0xb]]
    %p883 = scmp.lt.s32.totalorder %s881, 0
    %s884 = sadd.s32 %s881, 8
    %s885 = scalar_select %p883, %s884, %s881
    %p886 = scmp.gt.s32.totalorder %s885, 0
    %s887 = scalar_select %p886, %s885, 0
    %p888 = scmp.lt.s32.totalorder %s887, 8
    %s889 = scalar_select %p888, %s887, 8
    %p890 = scmp.lt.s32.totalorder %s882, 0
    %s891 = sadd.s32 %s882, 8
    %s892 = scalar_select %p890, %s891, %s882
    %p893 = scmp.gt.s32.totalorder %s892, 0
    %s894 = scalar_select %p893, %s892, 0
    %p895 = scmp.lt.s32.totalorder %s894, 8
    %s896 = scalar_select %p895, %s894, 8
    %vm897 = vcmp.ge.s32.totalorder %v719, 160
    %vm898 = vcmp.ge.s32.totalorder %v720, 160
    %vm899 = vcmp.lt.s32.totalorder %v719, 192
    %vm900 = vcmp.lt.s32.totalorder %v720, 192
    %vm901 = vmand %vm897, %vm899
    %vm902 = vmand %vm898, %vm900
    %v903 = vstv %s889
    %vm904 = vcmp.ge.s32.totalorder %v722, %v903
    %vm905 = vmand %vm901, %vm904
    %vm906 = vmand %vm902, %vm904
    %v907 = vstv %s896
    %vm908 = vcmp.lt.s32.totalorder %v722, %v907
    %vm909 = vmand %vm905, %vm908
    %vm910 = vmand %vm906, %vm908
    %vm911 = vmor %vm879, %vm909
    %vm912 = vmor %vm880, %vm910
    %v913 = vsel %vm911, %v715, -1e+09
    %v914 = vsel %vm912, %v717, -1e+09
    %915 = vst [vmem:[#allocation4] sm:$0xff] %v913
    %916 = vst [vmem:[#allocation4 + $0x8] sm:$0xff] %v914
    // Predicated region
    $region14: #{tpu_custom_call.1} parent=1 // pred_check
      _
    $region15: #{tpu_custom_call.1} parent=1 // pred_check_branch
      %918 = sbr.rel (0) target = $region17
    $region16: #{tpu_custom_call.1} parent=1 // pred_region
      %s920 = ssub.s32 256, 256
      %921 = vsyncadd [#allocation5], %s920
      %s923 = sshll.u32 [#allocation4], 4
      %s924 = int_to_ptr.vmem [resolvable:$true] %s923
      %926 = dma.vmem_to_hbm [thread:$0]  %s924, 256, %s4, [#allocation5]
    $region17: #{tpu_custom_call.1} parent=1 // pred_fallthru
      _
    // Predicated region
    $region18: #{tpu_custom_call.1} parent=1 // pred_check
      _
    $region19: #{tpu_custom_call.1} parent=1 // pred_check_branch
      %928 = sbr.rel (0) target = $region21
    $region20: #{tpu_custom_call.1} parent=1 // pred_region
      %929 = dma.done [#allocation5], 256
    $region21: #{tpu_custom_call.1} parent=1 // pred_fallthru
      _
    %930 = vsyncpa [#allocation5], 1

</llo_original>
